<compile_context>
chip_gen: v7x
topology: tpu7x:2x2x1
jax: 0.10.0
libtpu: 0.0.40
codegen_flags: <defaults>
</compile_context>

<pallas_src>
import jax
import jax.numpy as jnp
from jax.experimental import pallas as pl
from jax.experimental.pallas import tpu as pltpu

EPS = 1e-5


# ----------------------------- kernels -------------------------------------


def _pw_bn_relu_kernel(x_ref, w_ref, b_ref, o_ref):
    # 1x1 conv (BN scale folded into w) + bias + ReLU.
    acc = jnp.dot(x_ref[...], w_ref[...], preferred_element_type=jnp.float32)
    o_ref[...] = jnp.maximum(acc + b_ref[...], 0.0).astype(o_ref.dtype)


def _tail_proj_kernel(t_ref, w2_ref, b2_ref, w3_ref, b3_ref,
                      xs_ref, ws_ref, bs_ref, o_ref):
    # conv2 (3x3 as one K=9*Cp matmul) + BN2 + ReLU
    y2 = jnp.dot(t_ref[...], w2_ref[...], preferred_element_type=jnp.float32)
    y2 = jnp.maximum(y2 + b2_ref[...], 0.0)
    # conv3 (1x1) + BN3
    y3 = jnp.dot(y2.astype(w3_ref.dtype), w3_ref[...],
                 preferred_element_type=jnp.float32) + b3_ref[...]
    # projection shortcut (strided 1x1 + BN), residual add, final ReLU
    sc = jnp.dot(xs_ref[...], ws_ref[...],
                 preferred_element_type=jnp.float32) + bs_ref[...]
    o_ref[...] = jnp.maximum(y3 + sc, 0.0).astype(o_ref.dtype)


def _tail_id_kernel(t_ref, w2_ref, b2_ref, w3_ref, b3_ref, sc_ref, o_ref):
    y2 = jnp.dot(t_ref[...], w2_ref[...], preferred_element_type=jnp.float32)
    y2 = jnp.maximum(y2 + b2_ref[...], 0.0)
    y3 = jnp.dot(y2.astype(w3_ref.dtype), w3_ref[...],
                 preferred_element_type=jnp.float32) + b3_ref[...]
    o_ref[...] = jnp.maximum(y3 + sc_ref[...].astype(jnp.float32),
                             0.0).astype(o_ref.dtype)


# ------------------------- tiling / pallas_call wrappers --------------------


def _round_up(x, m):
    return ((x + m - 1) // m) * m


def _row_tile(m, row_bytes):
    """Largest power-of-two row tile (<=1024) under a conservative VMEM budget
    (safe for v7x's 64 MiB VMEM with double buffering); keep >=2 grid steps
    when possible so megacore can shard the 'parallel' axis."""
    budget = 8 * 1024 * 1024
    tm = 1024
    while tm > 8 and tm * row_bytes > budget:
        tm //= 2
    while tm > 8 and tm >= m:
        tm //= 2
    return tm


def _pad_rows(a, mp):
    m = a.shape[0]
    if mp == m:
        return a
    return jnp.pad(a, ((0, mp - m), (0, 0)))


def pw_conv_bn_relu(x2d, w, bias):
    """y = relu(x @ w + bias), tiled over rows."""
    m, cin = x2d.shape
    cout = w.shape[1]
    itemsize = jnp.dtype(x2d.dtype).itemsize
    tm = _row_tile(m, (cin + cout) * itemsize)
    mp = _round_up(m, tm)
    xp = _pad_rows(x2d, mp)
    flops = 2 * m * cin * cout
    bytes_accessed = itemsize * (m * cin + cin * cout + m * cout) + 4 * cout
    out = pl.pallas_call(
        _pw_bn_relu_kernel,
        out_shape=jax.ShapeDtypeStruct((mp, cout), x2d.dtype),
        grid=(mp // tm,),
        in_specs=[
            pl.BlockSpec((tm, cin), lambda i: (i, 0)),
            pl.BlockSpec((cin, cout), lambda i: (0, 0)),
            pl.BlockSpec((1, cout), lambda i: (0, 0)),
        ],
        out_specs=pl.BlockSpec((tm, cout), lambda i: (i, 0)),
        compiler_params=pltpu.CompilerParams(dimension_semantics=("parallel",)),
        cost_estimate=pl.CostEstimate(flops=flops, transcendentals=0,
                                      bytes_accessed=bytes_accessed),
    )(xp, w, bias.reshape(1, -1).astype(jnp.float32))
    return out[:m]


def fused_tail(tap_slab, w2f, b2, w3f, b3, shortcut, ws_f=None, bs=None,
               out_dtype=jnp.float32):
    """Fused conv2+BN2+ReLU -> conv3+BN3 -> (+proj shortcut) -> add -> ReLU."""
    m, k2 = tap_slab.shape
    cp = w3f.shape[0]
    cexp = w3f.shape[1]
    csc = shortcut.shape[1]
    itemsize = jnp.dtype(tap_slab.dtype).itemsize
    tm = _row_tile(m, (k2 + csc + cexp) * itemsize)
    mp = _round_up(m, tm)
    tap_p = _pad_rows(tap_slab, mp)
    sc_p = _pad_rows(shortcut, mp)
    b2r = b2.reshape(1, -1).astype(jnp.float32)
    b3r = b3.reshape(1, -1).astype(jnp.float32)
    cparams = pltpu.CompilerParams(dimension_semantics=("parallel",))

    if ws_f is not None:
        flops = 2 * m * (k2 * cp + cp * cexp + csc * cexp)
        bytes_accessed = itemsize * (m * (k2 + csc + cexp)
                                     + k2 * cp + cp * cexp + csc * cexp)
        out = pl.pallas_call(
            _tail_proj_kernel,
            out_shape=jax.ShapeDtypeStruct((mp, cexp), out_dtype),
            grid=(mp // tm,),
            in_specs=[
                pl.BlockSpec((tm, k2), lambda i: (i, 0)),
                pl.BlockSpec((k2, cp), lambda i: (0, 0)),
                pl.BlockSpec((1, cp), lambda i: (0, 0)),
                pl.BlockSpec((cp, cexp), lambda i: (0, 0)),
                pl.BlockSpec((1, cexp), lambda i: (0, 0)),
                pl.BlockSpec((tm, csc), lambda i: (i, 0)),
                pl.BlockSpec((csc, cexp), lambda i: (0, 0)),
                pl.BlockSpec((1, cexp), lambda i: (0, 0)),
            ],
            out_specs=pl.BlockSpec((tm, cexp), lambda i: (i, 0)),
            compiler_params=cparams,
            cost_estimate=pl.CostEstimate(flops=flops, transcendentals=0,
                                          bytes_accessed=bytes_accessed),
        )(tap_p, w2f, b2r, w3f, b3r, sc_p, ws_f,
          bs.reshape(1, -1).astype(jnp.float32))
    else:
        flops = 2 * m * (k2 * cp + cp * cexp)
        bytes_accessed = itemsize * (m * (k2 + csc + cexp)
                                     + k2 * cp + cp * cexp)
        out = pl.pallas_call(
            _tail_id_kernel,
            out_shape=jax.ShapeDtypeStruct((mp, cexp), out_dtype),
            grid=(mp // tm,),
            in_specs=[
                pl.BlockSpec((tm, k2), lambda i: (i, 0)),
                pl.BlockSpec((k2, cp), lambda i: (0, 0)),
                pl.BlockSpec((1, cp), lambda i: (0, 0)),
                pl.BlockSpec((cp, cexp), lambda i: (0, 0)),
                pl.BlockSpec((1, cexp), lambda i: (0, 0)),
                pl.BlockSpec((tm, csc), lambda i: (i, 0)),
            ],
            out_specs=pl.BlockSpec((tm, cexp), lambda i: (i, 0)),
            compiler_params=cparams,
            cost_estimate=pl.CostEstimate(flops=flops, transcendentals=0,
                                          bytes_accessed=bytes_accessed),
        )(tap_p, w2f, b2r, w3f, b3r, sc_p)
    return out[:m]


# --------------------------- module forward ---------------------------------


def fold_bn(gamma, beta, mean, var):
    scale = gamma / jnp.sqrt(var + EPS)
    bias = beta - mean * scale
    return scale, bias


def bottle_neck_forward(x_nchw, params, stride, compute_dtype=jnp.float32):
    """Bottle_Neck.forward: (N, Cin, H, W) -> (N, 4*planes, Ho, Wo).
    Use compute_dtype=jnp.bfloat16 on v6e/v7x for ~2x MXU throughput."""
    n, cin, h, w = x_nchw.shape
    cp = params["w1"].shape[1]
    cexp = 4 * cp
    x = jnp.transpose(x_nchw, (0, 2, 3, 1))  # NHWC

    s1, b1 = fold_bn(*params["bn1"])
    s2, b2 = fold_bn(*params["bn2"])
    s3, b3 = fold_bn(*params["bn3"])

    # Fold the BN scales into the conv weights at trace time (kernels add bias only).
    w1f = (params["w1"] * s1[None, :]).astype(compute_dtype)
    w2f = (params["w2"] * s2[None, None, None, :]).reshape(9 * cp, cp).astype(compute_dtype)
    w3f = (params["w3"] * s3[None, :]).astype(compute_dtype)

    xd = x.astype(compute_dtype)

    # --- conv1 (1x1) + bn1 + relu ---
    y1 = pw_conv_bn_relu(xd.reshape(-1, cin), w1f, b1)
    y1 = y1.reshape(n, h, w, cp)

    # --- 3x3 taps as one lane-dense (M_out, 9*Cp) slab ---
    # TODO(synk): tap slab is still assembled by XLA (pad + 9 strided views +
    # concat); building it in-kernel from halo tiles would cut the conv2 input
    # HBM traffic further.
    ho = (h - 1) // stride + 1
    wo = (w - 1) // stride + 1
    y1p = jnp.pad(y1, ((0, 0), (1, 1), (1, 1), (0, 0)))
    hs = stride * (ho - 1) + 1
    wsl = stride * (wo - 1) + 1
    taps = []
    for dy in range(3):
        for dx in range(3):
            v = y1p[:, dy:dy + hs:stride, dx:dx + wsl:stride, :]
            taps.append(v.reshape(-1, cp))
    tap_slab = jnp.concatenate(taps, axis=1)  # (N*Ho*Wo, 9*Cp)

    # --- conv2 + bn2 + relu + conv3 + bn3 + shortcut + add + relu (fused) ---
    if stride != 1 or cin != cexp:
        ss, bs = fold_bn(*params["bns"])
        wsf = (params["ws"] * ss[None, :]).astype(compute_dtype)
        xs = xd[:, ::stride, ::stride, :].reshape(-1, cin)
        out = fused_tail(tap_slab, w2f, b2, w3f, b3, xs, ws_f=wsf, bs=bs,
                         out_dtype=x.dtype)
    else:
        short = xd.reshape(-1, cin)
        out = fused_tail(tap_slab, w2f, b2, w3f, b3, short, out_dtype=x.dtype)

    out = out.reshape(n, ho, wo, cexp)
    return jnp.transpose(out, (0, 3, 1, 2))  # back to NCHW


# ------------------------------ reference -----------------------------------


def reference_forward(x_nchw, params, stride):
    x = jnp.transpose(x_nchw, (0, 2, 3, 1))
    cin = x.shape[-1]
    cp = params["w1"].shape[1]

    def conv(v, w_hwio, s, pad):
        return jax.lax.conv_general_dilated(
            v, w_hwio, (s, s), pad, dimension_numbers=("NHWC", "HWIO", "NHWC"))

    s1, b1 = fold_bn(*params["bn1"])
    y = jax.nn.relu(conv(x, params["w1"].reshape(1, 1, cin, cp), 1, "VALID") * s1 + b1)
    s2, b2 = fold_bn(*params["bn2"])
    y = jax.nn.relu(conv(y, params["w2"], stride, [(1, 1), (1, 1)]) * s2 + b2)
    s3, b3 = fold_bn(*params["bn3"])
    y = conv(y, params["w3"].reshape(1, 1, cp, 4 * cp), 1, "VALID") * s3 + b3
    if stride != 1 or cin != 4 * cp:
        ss, bs = fold_bn(*params["bns"])
        short = conv(x, params["ws"].reshape(1, 1, cin, 4 * cp), stride, "VALID") * ss + bs
    else:
        short = x
    out = jax.nn.relu(y + short)
    return jnp.transpose(out, (0, 3, 1, 2))


# -------------------------------- main --------------------------------------


def make_params(key, in_planes, planes):
    cexp = 4 * planes
    ks = jax.random.split(key, 8)

    def bn_params(k, c):
        k1, k2, k3, k4 = jax.random.split(k, 4)
        gamma = 1.0 + 0.1 * jax.random.normal(k1, (c,), jnp.float32)
        beta = 0.1 * jax.random.normal(k2, (c,), jnp.float32)
        mean = 0.1 * jax.random.normal(k3, (c,), jnp.float32)
        var = 1.0 + 0.1 * jnp.abs(jax.random.normal(k4, (c,), jnp.float32))
        return (gamma, beta, mean, var)

    return {
        "w1": 0.2 * jax.random.normal(ks[0], (in_planes, planes), jnp.float32),
        "bn1": bn_params(ks[1], planes),
        "w2": 0.2 * jax.random.normal(ks[2], (3, 3, planes, planes), jnp.float32),
        "bn2": bn_params(ks[3], planes),
        "w3": 0.2 * jax.random.normal(ks[4], (planes, cexp), jnp.float32),
        "bn3": bn_params(ks[5], cexp),
        "ws": 0.2 * jax.random.normal(ks[6], (in_planes, cexp), jnp.float32),
        "bns": bn_params(ks[7], cexp),
    }


if __name__ == "__main__":
    key = jax.random.PRNGKey(0)
    k1, k2, k3, k4 = jax.random.split(key, 4)

    # Case 1: projection shortcut (stride=2, in_planes != 4*planes).
    x1 = jax.random.normal(k1, (2, 4, 16, 16), jnp.float32)   # NCHW like PyTorch
    p1 = make_params(k2, 4, 4)
    out1 = jax.block_until_ready(bottle_neck_forward(x1, p1, stride=2))
    ref1 = jax.block_until_ready(reference_forward(x1, p1, stride=2))
    assert out1.shape == (2, 16, 8, 8), out1.shape
    assert jnp.allclose(out1, ref1, atol=1e-4, rtol=1e-4), \
        float(jnp.max(jnp.abs(out1 - ref1)))

    # Case 2: identity shortcut (stride=1, in_planes == 4*planes).
    x2 = jax.random.normal(k3, (2, 16, 16, 16), jnp.float32)
    p2 = make_params(k4, 16, 4)
    out2 = jax.block_until_ready(bottle_neck_forward(x2, p2, stride=1))
    ref2 = jax.block_until_ready(reference_forward(x2, p2, stride=1))
    assert out2.shape == (2, 16, 16, 16), out2.shape
    assert jnp.allclose(out2, ref2, atol=1e-4, rtol=1e-4), \
        float(jnp.max(jnp.abs(out2 - ref2)))

    # Case 3: bf16 matmul operands (v6e/v7x path) — loose sanity check.
    out3 = jax.block_until_ready(
        bottle_neck_forward(x1, p1, stride=2, compute_dtype=jnp.bfloat16))
    assert out3.shape == (2, 16, 8, 8), out3.shape
    assert bool(jnp.all(jnp.isfinite(out3)))
    assert float(jnp.max(jnp.abs(out3 - ref1))) < 0.5

    print("KERNEL_OK")
</pallas_src>

<mosaic_0001>
module attributes {stable_mosaic.version = 11 : i64} {
  func.func @_pw_bn_relu_kernel(%arg0: i32, %arg1: memref<256x4xf32, #tpu.memory_space<vmem>>, %arg2: memref<4x4xf32, #tpu.memory_space<vmem>>, %arg3: memref<1x4xf32, #tpu.memory_space<vmem>>, %arg4: memref<256x4xf32, #tpu.memory_space<vmem>>) attributes {dimension_semantics = [#tpu.dimension_semantics<parallel>], iteration_bounds = array<i64: 2>, scalar_prefetch = 0 : i64, scratch_operands = 0 : i64, tpu.core_type = #tpu.core_type<tc>, window_params = [{transform_indices = @transform_0, window_bounds = array<i64: 256, 4>}, {pipeline_mode = #tpu.pipeline_mode<synchronous>, transform_indices = @transform_1, window_bounds = array<i64: 4, 4>}, {pipeline_mode = #tpu.pipeline_mode<synchronous>, transform_indices = @transform_2, window_bounds = array<i64: 1, 4>}, {transform_indices = @transform_3, window_bounds = array<i64: 256, 4>}]} {
    %c0 = arith.constant 0 : index
    %c0_0 = arith.constant 0 : index
    %0 = vector.load %arg1[%c0, %c0_0] : memref<256x4xf32, #tpu.memory_space<vmem>>, vector<256x4xf32>
    %c0_1 = arith.constant 0 : index
    %c0_2 = arith.constant 0 : index
    %1 = vector.load %arg2[%c0_1, %c0_2] : memref<4x4xf32, #tpu.memory_space<vmem>>, vector<4x4xf32>
    %cst = arith.constant dense<0.000000e+00> : vector<256x4xf32>
    %2 = tpu.matmul %0, %1, %cst {dimension_numbers = #tpu.dot_dimension_numbers<[1], [0], [0], [1], [0, 0, 1, 1], [], []>} : vector<256x4xf32>, vector<4x4xf32>, vector<256x4xf32> -> vector<256x4xf32>
    %c0_3 = arith.constant 0 : index
    %c0_4 = arith.constant 0 : index
    %3 = vector.load %arg3[%c0_3, %c0_4] : memref<1x4xf32, #tpu.memory_space<vmem>>, vector<1x4xf32>
    %4 = vector.broadcast %3 : vector<1x4xf32> to vector<256x4xf32>
    %5 = arith.addf %2, %4 : vector<256x4xf32>
    %cst_5 = arith.constant 0.000000e+00 : f32
    %6 = vector.broadcast %cst_5 : f32 to vector<256x4xf32>
    %7 = arith.maximumf %5, %6 : vector<256x4xf32>
    %c0_6 = arith.constant 0 : index
    %c0_7 = arith.constant 0 : index
    %8 = vector.load %arg4[%c0_6, %c0_7] : memref<256x4xf32, #tpu.memory_space<vmem>>, vector<256x4xf32>
    tpu.vector_store %arg4[%c0_6, %c0_7], %7 {strides = array<i32>} : memref<256x4xf32, #tpu.memory_space<vmem>>, vector<256x4xf32>,
    return
  }
  func.func @transform_0(%arg0: i32) -> (i32, i32) {
    %c0_i32 = arith.constant 0 : i32
    %c0_i32_0 = arith.constant 0 : i32
    return %arg0, %c0_i32 : i32, i32
  }
  func.func @transform_1(%arg0: i32) -> (i32, i32) {
    %c0_i32 = arith.constant 0 : i32
    %c0_i32_0 = arith.constant 0 : i32
    %c0_i32_1 = arith.constant 0 : i32
    return %c0_i32, %c0_i32_0 : i32, i32
  }
  func.func @transform_2(%arg0: i32) -> (i32, i32) {
    %c0_i32 = arith.constant 0 : i32
    %c0_i32_0 = arith.constant 0 : i32
    %c0_i32_1 = arith.constant 0 : i32
    return %c0_i32, %c0_i32_0 : i32, i32
  }
  func.func @transform_3(%arg0: i32) -> (i32, i32) {
    %c0_i32 = arith.constant 0 : i32
    %c0_i32_0 = arith.constant 0 : i32
    return %arg0, %c0_i32 : i32, i32
  }
}

</mosaic_0001>

<llo_original>
// kernel: tpu_custom_call.1
$region0: #{tpu_custom_call.1}
  #allocation0 [shape = 'u32[]', space=smem, size = 0x4, offset = 0x4, fixed_abs, tag = 'smem constant byte address 0x4 - core index']
  #allocation1 [shape = 'u32[144,128]{1,0:T(1,128)}', space=vmem, size = 0x12000, scoped, tag = 'internal scratch']
  %s0 = inlined_call_operand.vmem [shape: f32[512,4], index: 0, kind: input, shape index: {}]
  %s1 = inlined_call_operand.vmem [shape: f32[4,4], index: 1, kind: input, shape index: {}]
  %s2 = inlined_call_operand.vmem [shape: f32[1,4], index: 2, kind: input, shape index: {}]
  %s3 = inlined_call_operand.vmem [shape: f32[512,4], index: 3, kind: output, shape index: {}]
  %s4 = sld [smem:[#allocation0]]
  $region45: #{tpu_custom_call.1} parent=0
    _
  %s6 = ssub.s32 1, %s4
  %s7 = scalar_select 0, %s6, %s4
  loop: start=0, step=1, limit=4
  $region2: #{tpu_custom_call.1} parent=0 // loop_pre_header
    _
  $region3: #{tpu_custom_call.1} parent=0 // loop_header
    %s9 = sphi 0, %s13
    %p10 = scmp.ge.s32.totalorder %s9, 4
    %s19 = sphi 0, %s21
    %s22 = sphi 0, %s19
    %s23 = sphi 0, %s22
    %s39 = sphi 0, %s23
    %s43 = sphi 0, %s43
    %s45 = sphi 0, %s43
    %s46 = sphi 0, %s45
    %s60 = sphi 0, %s46
    %s64 = sphi 0, %s64
    %s66 = sphi 0, %s64
    %s67 = sphi 0, %s66
    %s81 = sphi 0, %s67
    %s87 = sphi 0, %s89
    %s90 = sphi 0, %s87
    %s91 = sphi 0, %s90
    %s107 = sphi 0, %s91
  $region4: #{tpu_custom_call.1} parent=0 // loop_header_branch
    %12 = sbr.rel (%p10) target = $region8
  $region5: #{tpu_custom_call.1} parent=0 // loop_body
    %s14 = ssub.s32 %s9, 1
    %s15 = ssub.s32 %s9, 2
    %s16 = sadd.s32 %s9, 1
    %s17 = ssub.s32 %s9, %s16
    %p18 = scmp.eq.s32.totalorder %s17, 0
    %s20 = sadd.s32 %s19, 1
    %s21 = scalar_select %p18, %s19, %s20
    %p24 = pneg %p18
    %p25 = scmp.eq.s32.totalorder %s9, 1
    %p26 = por %p24, %p25
    %p27 = scmp.ne.s32.totalorder %s19, %s22
    %p28 = scmp.eq.s32.totalorder %s9, 0
    %p29 = por %p27, %p28
    %p30 = scmp.ne.s32.totalorder %s19, %s22
    %p31 = scmp.eq.s32.totalorder %s14, 1
    %p32 = por %p30, %p31
    %p33 = scmp.ne.s32.totalorder %s22, %s23
    %p34 = scmp.eq.s32.totalorder %s14, 0
    %p35 = por %p33, %p34
    %p36 = scmp.ne.s32.totalorder %s22, %s23
    %p37 = scmp.eq.s32.totalorder %s15, 1
    %p38 = por %p36, %p37
    %p40 = scmp.ne.s32.totalorder %s23, %s39
    %p41 = scmp.eq.s32.totalorder %s15, 0
    %p42 = por %p40, %p41
    %s44 = sadd.s32 %s43, 1
    %p47 = scmp.eq.s32.totalorder %s9, 1
    %p48 = scmp.ne.s32.totalorder %s43, %s45
    %p49 = scmp.eq.s32.totalorder %s9, 0
    %p50 = por %p48, %p49
    %p51 = scmp.ne.s32.totalorder %s43, %s45
    %p52 = scmp.eq.s32.totalorder %s14, 1
    %p53 = por %p51, %p52
    %p54 = scmp.ne.s32.totalorder %s45, %s46
    %p55 = scmp.eq.s32.totalorder %s14, 0
    %p56 = por %p54, %p55
    %p57 = scmp.ne.s32.totalorder %s45, %s46
    %p58 = scmp.eq.s32.totalorder %s15, 1
    %p59 = por %p57, %p58
    %p61 = scmp.ne.s32.totalorder %s46, %s60
    %p62 = scmp.eq.s32.totalorder %s15, 0
    %p63 = por %p61, %p62
    %s65 = sadd.s32 %s64, 1
    %p68 = scmp.eq.s32.totalorder %s9, 1
    %p69 = scmp.ne.s32.totalorder %s64, %s66
    %p70 = scmp.eq.s32.totalorder %s9, 0
    %p71 = por %p69, %p70
    %p72 = scmp.ne.s32.totalorder %s64, %s66
    %p73 = scmp.eq.s32.totalorder %s14, 1
    %p74 = por %p72, %p73
    %p75 = scmp.ne.s32.totalorder %s66, %s67
    %p76 = scmp.eq.s32.totalorder %s14, 0
    %p77 = por %p75, %p76
    %p78 = scmp.ne.s32.totalorder %s66, %s67
    %p79 = scmp.eq.s32.totalorder %s15, 1
    %p80 = por %p78, %p79
    %p82 = scmp.ne.s32.totalorder %s67, %s81
    %p83 = scmp.eq.s32.totalorder %s15, 0
    %p84 = por %p82, %p83
    %s85 = ssub.s32 %s9, %s16
    %p86 = scmp.eq.s32.totalorder %s85, 0
    %s88 = sadd.s32 %s87, 1
    %s89 = scalar_select %p86, %s87, %s88
    %p92 = pneg %p86
    %p93 = scmp.eq.s32.totalorder %s9, 1
    %p94 = por %p92, %p93
    %p95 = scmp.ne.s32.totalorder %s87, %s90
    %p96 = scmp.eq.s32.totalorder %s9, 0
    %p97 = por %p95, %p96
    %p98 = scmp.ne.s32.totalorder %s87, %s90
    %p99 = scmp.eq.s32.totalorder %s14, 1
    %p100 = por %p98, %p99
    %p101 = scmp.ne.s32.totalorder %s90, %s91
    %p102 = scmp.eq.s32.totalorder %s14, 0
    %p103 = por %p101, %p102
    %p104 = scmp.ne.s32.totalorder %s90, %s91
    %p105 = scmp.eq.s32.totalorder %s15, 1
    %p106 = por %p104, %p105
    %p108 = scmp.ne.s32.totalorder %s91, %s107
    %p109 = scmp.eq.s32.totalorder %s15, 0
    %p110 = por %p108, %p109
    %p111 = scmp.le.s32.totalorder 1, %s9
    %p112 = scmp.lt.s32.totalorder %s9, 3
    %p113 = pnand %p111, %p112
    %p114 = pneg %p113
    // Predicated region
    $region9: #{tpu_custom_call.1} parent=5 // pred_check
      _
    $region10: #{tpu_custom_call.1} parent=5 // pred_check_branch
      %116 = sbr.rel (%p113) target = $region12
    $region11: #{tpu_custom_call.1} parent=5 // pred_region
      %s117 = ssub.s32 %s9, 1
      // Predicated region
      $region13: #{tpu_custom_call.1} parent=11 // pred_check
        %p118 = pneg %p56
      $region14: #{tpu_custom_call.1} parent=11 // pred_check_branch
        %120 = sbr.rel (%p118) target = $region16
      $region15: #{tpu_custom_call.1} parent=11 // pred_region
        _
      $region16: #{tpu_custom_call.1} parent=11 // pred_fallthru
        _
      // Predicated region
      $region17: #{tpu_custom_call.1} parent=11 // pred_check
        %p121 = pneg %p77
      $region18: #{tpu_custom_call.1} parent=11 // pred_check_branch
        %123 = sbr.rel (%p121) target = $region20
      $region19: #{tpu_custom_call.1} parent=11 // pred_region
        _
      $region20: #{tpu_custom_call.1} parent=11 // pred_fallthru
        _
    $region12: #{tpu_custom_call.1} parent=5 // pred_fallthru
      _
    %p124 = scmp.lt.s32.totalorder %s9, 2
    // Predicated region
    $region21: #{tpu_custom_call.1} parent=5 // pred_check
      %p125 = pneg %p124
    $region22: #{tpu_custom_call.1} parent=5 // pred_check_branch
      %127 = sbr.rel (%p125) target = $region24
    $region23: #{tpu_custom_call.1} parent=5 // pred_region
      // Predicated region
      $region25: #{tpu_custom_call.1} parent=23 // pred_check
        %p128 = pneg %p29
      $region26: #{tpu_custom_call.1} parent=23 // pred_check_branch
        %130 = sbr.rel (%p128) target = $region28
      $region27: #{tpu_custom_call.1} parent=23 // pred_region
        %s131 = smul.u32 32, %s9
        %p132 = scmp.lt.s32.totalorder %s131, 63
        %s133 = scalar_select %p132, %s131, 63
        %s134 = smul.addr %s133, 8
        %s135 = scalar_lea.vmem %s0, %s134
        %s136 = smul.u32 32, %s9
      $region28: #{tpu_custom_call.1} parent=23 // pred_fallthru
        _
    $region24: #{tpu_custom_call.1} parent=5 // pred_fallthru
      _
    %p137 = scmp.le.s32.totalorder 1, %s9
    %p138 = scmp.lt.s32.totalorder %s9, 3
    %p139 = pnand %p137, %p138
    %p140 = pneg %p139
    // Predicated region
    $region29: #{tpu_custom_call.1} parent=5 // pred_check
      _
    $region30: #{tpu_custom_call.1} parent=5 // pred_check_branch
      %142 = sbr.rel (%p139) target = $region32
    $region31: #{tpu_custom_call.1} parent=5 // pred_region
      %s143 = ssub.s32 %s9, 1
      %s144 = smul.u32 32, %s14
      %p145 = scmp.lt.s32.totalorder %s144, 63
      %s146 = scalar_select %p145, %s144, 63
      %s147 = smul.addr %s146, 8
      %s148 = scalar_lea.vmem %s0, %s147
      %p149 = pneg %p35
      %p150 = pneg %p32
      %p151 = pneg %p56
      %p152 = pneg %p53
      %p153 = pneg %p77
      %p154 = pneg %p74
      %p155 = pneg %p103
      %p156 = pneg %p100
      %s157 = smul.u32 32, %s14
      %p158 = scmp.lt.s32.totalorder %s157, 63
      %s159 = scalar_select %p158, %s157, 63
      %s160 = smul.addr %s159, 8
      %s161 = scalar_lea.vmem %s3, %s160
      %s162 = smul.u32 32, %s14
      %p163 = scmp.lt.s32.totalorder %s162, 63
      %s164 = scalar_select %p163, %s162, 63
      %s165 = smul.addr %s164, 8
      %s166 = scalar_lea.vmem %s0, %s165
      %s167 = smul.u32 32, %s14
      %s168 = smul.u32 32, %s14
      %p169 = scmp.lt.s32.totalorder %s168, 63
      %s170 = scalar_select %p169, %s168, 63
      %s171 = smul.addr %s170, 8
      %s172 = scalar_lea.vmem %s3, %s171
      %s173 = smul.u32 32, %s14
      %v174 = vld [vmem:[%s166] sm:$0xff]
      %v175 = vld [vmem:[%s166 + $0x8] sm:$0xff]
      %v176 = vld [vmem:[%s166 + $0x10] sm:$0xff]
      %v177 = vld [vmem:[%s166 + $0x18] sm:$0xff]
      %v178 = vld [vmem:[%s166 + $0x20] sm:$0xff]
      %v179 = vld [vmem:[%s166 + $0x28] sm:$0xff]
      %v180 = vld [vmem:[%s166 + $0x30] sm:$0xff]
      %v181 = vld [vmem:[%s166 + $0x38] sm:$0xff]
      %v182 = vld [vmem:[%s166 + $0x40] sm:$0xff]
      %v183 = vld [vmem:[%s166 + $0x48] sm:$0xff]
      %v184 = vld [vmem:[%s166 + $0x50] sm:$0xff]
      %v185 = vld [vmem:[%s166 + $0x58] sm:$0xff]
      %v186 = vld [vmem:[%s166 + $0x60] sm:$0xff]
      %v187 = vld [vmem:[%s166 + $0x68] sm:$0xff]
      %v188 = vld [vmem:[%s166 + $0x70] sm:$0xff]
      %v189 = vld [vmem:[%s166 + $0x78] sm:$0xff]
      %v190 = vld [vmem:[%s166 + $0x80] sm:$0xff]
      %v191 = vld [vmem:[%s166 + $0x88] sm:$0xff]
      %v192 = vld [vmem:[%s166 + $0x90] sm:$0xff]
      %v193 = vld [vmem:[%s166 + $0x98] sm:$0xff]
      %v194 = vld [vmem:[%s166 + $0xa0] sm:$0xff]
      %v195 = vld [vmem:[%s166 + $0xa8] sm:$0xff]
      %v196 = vld [vmem:[%s166 + $0xb0] sm:$0xff]
      %v197 = vld [vmem:[%s166 + $0xb8] sm:$0xff]
      %v198 = vld [vmem:[%s166 + $0xc0] sm:$0xff]
      %v199 = vld [vmem:[%s166 + $0xc8] sm:$0xff]
      %v200 = vld [vmem:[%s166 + $0xd0] sm:$0xff]
      %v201 = vld [vmem:[%s166 + $0xd8] sm:$0xff]
      %v202 = vld [vmem:[%s166 + $0xe0] sm:$0xff]
      %v203 = vld [vmem:[%s166 + $0xe8] sm:$0xff]
      %v204 = vld [vmem:[%s166 + $0xf0] sm:$0xff]
      %v205 = vld [vmem:[%s166 + $0xf8] sm:$0xff]
      %v206 = vld [vmem:[%s1] sm:$0xf]
      %v207 = vld [vmem:[%s2] sm:$0x1]
      %v209 = vlaneseq
      %v210 = vshrl.u32 %v209, 7
      %v211 = vsub.s32 0, %v210
      %v212 = vrot.slane %v207, %v211
      %vm214 = vcmask 31744
      %v216 = vsel %vm214, %v174, 0
      %v219 = vsel %vm214, %v175, 0
      %v222 = vsel %vm214, %v176, 0
      %v225 = vsel %vm214, %v177, 0
      %v228 = vsel %vm214, %v178, 0
      %v231 = vsel %vm214, %v179, 0
      %v234 = vsel %vm214, %v180, 0
      %v237 = vsel %vm214, %v181, 0
      %v240 = vsel %vm214, %v182, 0
      %v243 = vsel %vm214, %v183, 0
      %v246 = vsel %vm214, %v184, 0
      %v249 = vsel %vm214, %v185, 0
      %v252 = vsel %vm214, %v186, 0
      %v255 = vsel %vm214, %v187, 0
      %v258 = vsel %vm214, %v188, 0
      %v261 = vsel %vm214, %v189, 0
      %v264 = vsel %vm214, %v190, 0
      %v267 = vsel %vm214, %v191, 0
      %v270 = vsel %vm214, %v192, 0
      %v273 = vsel %vm214, %v193, 0
      %v276 = vsel %vm214, %v194, 0
      %v279 = vsel %vm214, %v195, 0
      %v282 = vsel %vm214, %v196, 0
      %v285 = vsel %vm214, %v197, 0
      %v288 = vsel %vm214, %v198, 0
      %v291 = vsel %vm214, %v199, 0
      %v294 = vsel %vm214, %v200, 0
      %v297 = vsel %vm214, %v201, 0
      %v300 = vsel %vm214, %v202, 0
      %v303 = vsel %vm214, %v203, 0
      %v306 = vsel %vm214, %v204, 0
      %v309 = vsel %vm214, %v205, 0
      %vm311 = vcmask 1043456
      %v313 = vsel %vm311, %v206, 0
      %315 = vmatprep.subr.mxu0 0.0
      %316 = vmatpush1.msra.mxu0 %v313
      %317 = vmatprep.subr.mxu0 0.0
      %318 = vmatpush1.msra.mxu0 0.0
      %319 = vmatprep.subr.mxu0 0.0
      %320 = vmatpush1.msra.mxu0 0.0
      %321 = vmatprep.subr.mxu0 0.0
      %322 = vmatpush1.msra.mxu0 0.0
      %323 = vmatprep.subr.mxu0 0.0
      %324 = vmatpush1.msra.mxu0 0.0
      %325 = vmatprep.subr.mxu0 0.0
      %326 = vmatpush1.msra.mxu0 0.0
      %327 = vmatprep.subr.mxu0 0.0
      %328 = vmatpush1.msra.mxu0 0.0
      %329 = vmatprep.subr.mxu0 0.0
      %330 = vmatpush1.msra.mxu0 0.0
      %331 = vmatprep.subr.mxu0 0.0
      %332 = vmatpush1.msra.mxu0 0.0
      %333 = vmatprep.subr.mxu0 0.0
      %334 = vmatpush1.msra.mxu0 0.0
      %335 = vmatprep.subr.mxu0 0.0
      %336 = vmatpush1.msra.mxu0 0.0
      %337 = vmatprep.subr.mxu0 0.0
      %338 = vmatpush1.msra.mxu0 0.0
      %339 = vmatprep.subr.mxu0 0.0
      %340 = vmatpush1.msra.mxu0 0.0
      %341 = vmatprep.subr.mxu0 0.0
      %342 = vmatpush1.msra.mxu0 0.0
      %343 = vmatprep.subr.mxu0 0.0
      %344 = vmatpush1.msra.mxu0 0.0
      %345 = vmatprep.subr.mxu0 0.0
      %346 = vmatpush1.msra.mxu0 0.0
      %347 = vmatprep.subr.mxu0 0.0
      %348 = vmatpush1.msra.mxu0 0.0
      %349 = vmatprep.subr.mxu0 0.0
      %350 = vmatpush1.msra.mxu0 0.0
      %351 = vmatprep.subr.mxu0 0.0
      %352 = vmatpush1.msra.mxu0 0.0
      %353 = vmatprep.subr.mxu0 0.0
      %354 = vmatpush1.msra.mxu0 0.0
      %355 = vmatprep.subr.mxu0 0.0
      %356 = vmatpush1.msra.mxu0 0.0
      %357 = vmatprep.subr.mxu0 0.0
      %358 = vmatpush1.msra.mxu0 0.0
      %359 = vmatprep.subr.mxu0 0.0
      %360 = vmatpush1.msra.mxu0 0.0
      %361 = vmatprep.subr.mxu0 0.0
      %362 = vmatpush1.msra.mxu0 0.0
      %363 = vmatprep.subr.mxu0 0.0
      %364 = vmatpush1.msra.mxu0 0.0
      %365 = vmatprep.subr.mxu0 0.0
      %366 = vmatpush1.msra.mxu0 0.0
      %367 = vmatprep.subr.mxu0 0.0
      %368 = vmatpush1.msra.mxu0 0.0
      %369 = vmatprep.subr.mxu0 0.0
      %370 = vmatpush1.msra.mxu0 0.0
      %371 = vmatprep.subr.mxu0 0.0
      %372 = vmatpush1.msra.mxu0 0.0
      %373 = vmatprep.subr.mxu0 0.0
      %374 = vmatpush1.msra.mxu0 0.0
      %375 = vmatprep.subr.mxu0 0.0
      %376 = vmatpush1.msra.mxu0 0.0
      %377 = vmatprep.subr.mxu0 0.0
      %378 = vmatpush1.msra.mxu0 0.0
      %379 = vmatprep.mubr.f32.mxu0 0.0
      %380 = vmatmul.mubr.f32.gmra.mrb[0].mxu0 %v216
      %v381 = vpop.f32.mrb[0].mxu0
      %v382 = vadd.f32 %v212, %v381
      %v383 = vpop.f32.mrb[0].mxu0
      %384 = vmatprep.mubr.f32.mxu0 0.0
      %385 = vmatmul.mubr.f32.gmra.mrb[0].mxu0 %v219
      %v386 = vpop.f32.mrb[0].mxu0
      %v387 = vadd.f32 %v212, %v386
      %v388 = vpop.f32.mrb[0].mxu0
      %389 = vmatprep.mubr.f32.mxu0 0.0
      %390 = vmatmul.mubr.f32.gmra.mrb[0].mxu0 %v222
      %v391 = vpop.f32.mrb[0].mxu0
      %v392 = vadd.f32 %v212, %v391
      %v393 = vpop.f32.mrb[0].mxu0
      %394 = vmatprep.mubr.f32.mxu0 0.0
      %395 = vmatmul.mubr.f32.gmra.mrb[0].mxu0 %v225
      %v396 = vpop.f32.mrb[0].mxu0
      %v397 = vadd.f32 %v212, %v396
      %v398 = vpop.f32.mrb[0].mxu0
      %399 = vmatprep.mubr.f32.mxu0 0.0
      %400 = vmatmul.mubr.f32.gmra.mrb[0].mxu0 %v228
      %v401 = vpop.f32.mrb[0].mxu0
      %v402 = vadd.f32 %v212, %v401
      %v403 = vpop.f32.mrb[0].mxu0
      %404 = vmatprep.mubr.f32.mxu0 0.0
      %405 = vmatmul.mubr.f32.gmra.mrb[0].mxu0 %v231
      %v406 = vpop.f32.mrb[0].mxu0
      %v407 = vadd.f32 %v212, %v406
      %v408 = vpop.f32.mrb[0].mxu0
      %409 = vmatprep.mubr.f32.mxu0 0.0
      %410 = vmatmul.mubr.f32.gmra.mrb[0].mxu0 %v234
      %v411 = vpop.f32.mrb[0].mxu0
      %v412 = vadd.f32 %v212, %v411
      %v413 = vpop.f32.mrb[0].mxu0
      %414 = vmatprep.mubr.f32.mxu0 0.0
      %415 = vmatmul.mubr.f32.gmra.mrb[0].mxu0 %v237
      %v416 = vpop.f32.mrb[0].mxu0
      %v417 = vadd.f32 %v212, %v416
      %v418 = vpop.f32.mrb[0].mxu0
      %419 = vmatprep.mubr.f32.mxu0 0.0
      %420 = vmatmul.mubr.f32.gmra.mrb[0].mxu0 %v240
      %v421 = vpop.f32.mrb[0].mxu0
      %v422 = vadd.f32 %v212, %v421
      %v423 = vpop.f32.mrb[0].mxu0
      %424 = vmatprep.mubr.f32.mxu0 0.0
      %425 = vmatmul.mubr.f32.gmra.mrb[0].mxu0 %v243
      %v426 = vpop.f32.mrb[0].mxu0
      %v427 = vadd.f32 %v212, %v426
      %v428 = vpop.f32.mrb[0].mxu0
      %429 = vmatprep.mubr.f32.mxu0 0.0
      %430 = vmatmul.mubr.f32.gmra.mrb[0].mxu0 %v246
      %v431 = vpop.f32.mrb[0].mxu0
      %v432 = vadd.f32 %v212, %v431
      %v433 = vpop.f32.mrb[0].mxu0
      %434 = vmatprep.mubr.f32.mxu0 0.0
      %435 = vmatmul.mubr.f32.gmra.mrb[0].mxu0 %v249
      %v436 = vpop.f32.mrb[0].mxu0
      %v437 = vadd.f32 %v212, %v436
      %v438 = vpop.f32.mrb[0].mxu0
      %439 = vmatprep.mubr.f32.mxu0 0.0
      %440 = vmatmul.mubr.f32.gmra.mrb[0].mxu0 %v252
      %v441 = vpop.f32.mrb[0].mxu0
      %v442 = vadd.f32 %v212, %v441
      %v443 = vpop.f32.mrb[0].mxu0
      %444 = vmatprep.mubr.f32.mxu0 0.0
      %445 = vmatmul.mubr.f32.gmra.mrb[0].mxu0 %v255
      %v446 = vpop.f32.mrb[0].mxu0
      %v447 = vadd.f32 %v212, %v446
      %v448 = vpop.f32.mrb[0].mxu0
      %449 = vmatprep.mubr.f32.mxu0 0.0
      %450 = vmatmul.mubr.f32.gmra.mrb[0].mxu0 %v258
      %v451 = vpop.f32.mrb[0].mxu0
      %v452 = vadd.f32 %v212, %v451
      %v453 = vpop.f32.mrb[0].mxu0
      %454 = vmatprep.mubr.f32.mxu0 0.0
      %455 = vmatmul.mubr.f32.gmra.mrb[0].mxu0 %v261
      %v456 = vpop.f32.mrb[0].mxu0
      %v457 = vadd.f32 %v212, %v456
      %v458 = vpop.f32.mrb[0].mxu0
      %459 = vmatprep.mubr.f32.mxu0 0.0
      %460 = vmatmul.mubr.f32.gmra.mrb[0].mxu0 %v264
      %v461 = vpop.f32.mrb[0].mxu0
      %v462 = vadd.f32 %v212, %v461
      %v463 = vpop.f32.mrb[0].mxu0
      %464 = vmatprep.mubr.f32.mxu0 0.0
      %465 = vmatmul.mubr.f32.gmra.mrb[0].mxu0 %v267
      %v466 = vpop.f32.mrb[0].mxu0
      %v467 = vadd.f32 %v212, %v466
      %v468 = vpop.f32.mrb[0].mxu0
      %469 = vmatprep.mubr.f32.mxu0 0.0
      %470 = vmatmul.mubr.f32.gmra.mrb[0].mxu0 %v270
      %v471 = vpop.f32.mrb[0].mxu0
      %v472 = vadd.f32 %v212, %v471
      %v473 = vpop.f32.mrb[0].mxu0
      %474 = vmatprep.mubr.f32.mxu0 0.0
      %475 = vmatmul.mubr.f32.gmra.mrb[0].mxu0 %v273
      %v476 = vpop.f32.mrb[0].mxu0
      %v477 = vadd.f32 %v212, %v476
      %v478 = vpop.f32.mrb[0].mxu0
      %479 = vmatprep.mubr.f32.mxu0 0.0
      %480 = vmatmul.mubr.f32.gmra.mrb[0].mxu0 %v276
      %v481 = vpop.f32.mrb[0].mxu0
      %v482 = vadd.f32 %v212, %v481
      %v483 = vpop.f32.mrb[0].mxu0
      %484 = vmatprep.mubr.f32.mxu0 0.0
      %485 = vmatmul.mubr.f32.gmra.mrb[0].mxu0 %v279
      %v486 = vpop.f32.mrb[0].mxu0
      %v487 = vadd.f32 %v212, %v486
      %v488 = vpop.f32.mrb[0].mxu0
      %489 = vmatprep.mubr.f32.mxu0 0.0
      %490 = vmatmul.mubr.f32.gmra.mrb[0].mxu0 %v282
      %v491 = vpop.f32.mrb[0].mxu0
      %v492 = vadd.f32 %v212, %v491
      %v493 = vpop.f32.mrb[0].mxu0
      %494 = vmatprep.mubr.f32.mxu0 0.0
      %495 = vmatmul.mubr.f32.gmra.mrb[0].mxu0 %v285
      %v496 = vpop.f32.mrb[0].mxu0
      %v497 = vadd.f32 %v212, %v496
      %v498 = vpop.f32.mrb[0].mxu0
      %499 = vmatprep.mubr.f32.mxu0 0.0
      %500 = vmatmul.mubr.f32.gmra.mrb[0].mxu0 %v288
      %v501 = vpop.f32.mrb[0].mxu0
      %v502 = vadd.f32 %v212, %v501
      %v503 = vpop.f32.mrb[0].mxu0
      %504 = vmatprep.mubr.f32.mxu0 0.0
      %505 = vmatmul.mubr.f32.gmra.mrb[0].mxu0 %v291
      %v506 = vpop.f32.mrb[0].mxu0
      %v507 = vadd.f32 %v212, %v506
      %v508 = vpop.f32.mrb[0].mxu0
      %509 = vmatprep.mubr.f32.mxu0 0.0
      %510 = vmatmul.mubr.f32.gmra.mrb[0].mxu0 %v294
      %v511 = vpop.f32.mrb[0].mxu0
      %v512 = vadd.f32 %v212, %v511
      %v513 = vpop.f32.mrb[0].mxu0
      %514 = vmatprep.mubr.f32.mxu0 0.0
      %515 = vmatmul.mubr.f32.gmra.mrb[0].mxu0 %v297
      %v516 = vpop.f32.mrb[0].mxu0
      %v517 = vadd.f32 %v212, %v516
      %v518 = vpop.f32.mrb[0].mxu0
      %519 = vmatprep.mubr.f32.mxu0 0.0
      %520 = vmatmul.mubr.f32.gmra.mrb[0].mxu0 %v300
      %v521 = vpop.f32.mrb[0].mxu0
      %v522 = vadd.f32 %v212, %v521
      %v523 = vpop.f32.mrb[0].mxu0
      %524 = vmatprep.mubr.f32.mxu0 0.0
      %525 = vmatmul.mubr.f32.gmra.mrb[0].mxu0 %v303
      %v526 = vpop.f32.mrb[0].mxu0
      %v527 = vadd.f32 %v212, %v526
      %v528 = vpop.f32.mrb[0].mxu0
      %529 = vmatprep.mubr.f32.mxu0 0.0
      %530 = vmatmul.mubr.f32.gmra.mrb[0].mxu0 %v306
      %v531 = vpop.f32.mrb[0].mxu0
      %v532 = vadd.f32 %v212, %v531
      %v533 = vpop.f32.mrb[0].mxu0
      %534 = vmatprep.mubr.f32.mxu0 0.0
      %535 = vmatmul.mubr.f32.gmra.mrb[0].mxu0 %v309
      %v536 = vpop.f32.mrb[0].mxu0
      %v537 = vadd.f32 %v212, %v536
      %v538 = vpop.f32.mrb[0].mxu0
      %539 = vdwg.mxu0
      %v540 = vmax.f32 %v382, 0.0
      %v541 = vmax.f32 %v387, 0.0
      %v542 = vmax.f32 %v392, 0.0
      %v543 = vmax.f32 %v397, 0.0
      %v544 = vmax.f32 %v402, 0.0
      %v545 = vmax.f32 %v407, 0.0
      %v546 = vmax.f32 %v412, 0.0
      %v547 = vmax.f32 %v417, 0.0
      %v548 = vmax.f32 %v422, 0.0
      %v549 = vmax.f32 %v427, 0.0
      %v550 = vmax.f32 %v432, 0.0
      %v551 = vmax.f32 %v437, 0.0
      %v552 = vmax.f32 %v442, 0.0
      %v553 = vmax.f32 %v447, 0.0
      %v554 = vmax.f32 %v452, 0.0
      %v555 = vmax.f32 %v457, 0.0
      %v556 = vmax.f32 %v462, 0.0
      %v557 = vmax.f32 %v467, 0.0
      %v558 = vmax.f32 %v472, 0.0
      %v559 = vmax.f32 %v477, 0.0
      %v560 = vmax.f32 %v482, 0.0
      %v561 = vmax.f32 %v487, 0.0
      %v562 = vmax.f32 %v492, 0.0
      %v563 = vmax.f32 %v497, 0.0
      %v564 = vmax.f32 %v502, 0.0
      %v565 = vmax.f32 %v507, 0.0
      %v566 = vmax.f32 %v512, 0.0
      %v567 = vmax.f32 %v517, 0.0
      %v568 = vmax.f32 %v522, 0.0
      %v569 = vmax.f32 %v527, 0.0
      %v570 = vmax.f32 %v532, 0.0
      %v571 = vmax.f32 %v537, 0.0
      %572 = vst.msk [vmem:[%s172] sm:$0xff] %vm214, %v540
      %573 = vst.msk [vmem:[%s172 + $0x8] sm:$0xff] %vm214, %v541
      %574 = vst.msk [vmem:[%s172 + $0x10] sm:$0xff] %vm214, %v542
      %575 = vst.msk [vmem:[%s172 + $0x18] sm:$0xff] %vm214, %v543
      %576 = vst.msk [vmem:[%s172 + $0x20] sm:$0xff] %vm214, %v544
      %577 = vst.msk [vmem:[%s172 + $0x28] sm:$0xff] %vm214, %v545
      %578 = vst.msk [vmem:[%s172 + $0x30] sm:$0xff] %vm214, %v546
      %579 = vst.msk [vmem:[%s172 + $0x38] sm:$0xff] %vm214, %v547
      %580 = vst.msk [vmem:[%s172 + $0x40] sm:$0xff] %vm214, %v548
      %581 = vst.msk [vmem:[%s172 + $0x48] sm:$0xff] %vm214, %v549
      %582 = vst.msk [vmem:[%s172 + $0x50] sm:$0xff] %vm214, %v550
      %583 = vst.msk [vmem:[%s172 + $0x58] sm:$0xff] %vm214, %v551
      %584 = vst.msk [vmem:[%s172 + $0x60] sm:$0xff] %vm214, %v552
      %585 = vst.msk [vmem:[%s172 + $0x68] sm:$0xff] %vm214, %v553
      %586 = vst.msk [vmem:[%s172 + $0x70] sm:$0xff] %vm214, %v554
      %587 = vst.msk [vmem:[%s172 + $0x78] sm:$0xff] %vm214, %v555
      %588 = vst.msk [vmem:[%s172 + $0x80] sm:$0xff] %vm214, %v556
      %589 = vst.msk [vmem:[%s172 + $0x88] sm:$0xff] %vm214, %v557
      %590 = vst.msk [vmem:[%s172 + $0x90] sm:$0xff] %vm214, %v558
      %591 = vst.msk [vmem:[%s172 + $0x98] sm:$0xff] %vm214, %v559
      %592 = vst.msk [vmem:[%s172 + $0xa0] sm:$0xff] %vm214, %v560
      %593 = vst.msk [vmem:[%s172 + $0xa8] sm:$0xff] %vm214, %v561
      %594 = vst.msk [vmem:[%s172 + $0xb0] sm:$0xff] %vm214, %v562
      %595 = vst.msk [vmem:[%s172 + $0xb8] sm:$0xff] %vm214, %v563
      %596 = vst.msk [vmem:[%s172 + $0xc0] sm:$0xff] %vm214, %v564
      %597 = vst.msk [vmem:[%s172 + $0xc8] sm:$0xff] %vm214, %v565
      %598 = vst.msk [vmem:[%s172 + $0xd0] sm:$0xff] %vm214, %v566
      %599 = vst.msk [vmem:[%s172 + $0xd8] sm:$0xff] %vm214, %v567
      %600 = vst.msk [vmem:[%s172 + $0xe0] sm:$0xff] %vm214, %v568
      %601 = vst.msk [vmem:[%s172 + $0xe8] sm:$0xff] %vm214, %v569
      %602 = vst.msk [vmem:[%s172 + $0xf0] sm:$0xff] %vm214, %v570
      %603 = vst.msk [vmem:[%s172 + $0xf8] sm:$0xff] %vm214, %v571
      %s604 = smul.u32 32, %s14
      %p605 = scmp.lt.s32.totalorder %s604, 63
      %s606 = scalar_select %p605, %s604, 63
      %s607 = smul.addr %s606, 8
      %s608 = scalar_lea.vmem %s3, %s607
      // Predicated region
      $region33: #{tpu_custom_call.1} parent=31 // pred_check
        %p609 = pneg %p100
      $region34: #{tpu_custom_call.1} parent=31 // pred_check_branch
        %611 = sbr.rel (%p609) target = $region36
      $region35: #{tpu_custom_call.1} parent=31 // pred_region
        %s612 = smul.u32 32, %s14
      $region36: #{tpu_custom_call.1} parent=31 // pred_fallthru
        _
    $region32: #{tpu_custom_call.1} parent=5 // pred_fallthru
      _
    %p613 = scmp.le.s32.totalorder 2, %s9
    // Predicated region
    $region37: #{tpu_custom_call.1} parent=5 // pred_check
      %p614 = pneg %p613
    $region38: #{tpu_custom_call.1} parent=5 // pred_check_branch
      %616 = sbr.rel (%p614) target = $region40
    $region39: #{tpu_custom_call.1} parent=5 // pred_region
      %s617 = ssub.s32 %s9, 2
      // Predicated region
      $region41: #{tpu_custom_call.1} parent=39 // pred_check
        %p618 = pneg %p106
      $region42: #{tpu_custom_call.1} parent=39 // pred_check_branch
        %620 = sbr.rel (%p618) target = $region44
      $region43: #{tpu_custom_call.1} parent=39 // pred_region
        %s621 = smul.u32 32, %s15
        %p622 = scmp.lt.s32.totalorder %s621, 63
        %s623 = scalar_select %p622, %s621, 63
        %s624 = smul.addr %s623, 8
        %s625 = scalar_lea.vmem %s3, %s624
      $region44: #{tpu_custom_call.1} parent=39 // pred_fallthru
        _
    $region40: #{tpu_custom_call.1} parent=5 // pred_fallthru
      _
  $region6: #{tpu_custom_call.1} parent=0 // loop_footer
    %s13 = sadd.s32 1, %s9
  $region7: #{tpu_custom_call.1} parent=0 // loop_footer_branch
    %8 = sbr.rel target = $region3
  $region8: #{tpu_custom_call.1} parent=0 // loop_exit
    _

</llo_original>
